<compile_context>
chip_gen: v7x
topology: tpu7x:2x2x1
jax: 0.10.0
libtpu: 0.0.40
codegen_flags: <defaults>
</compile_context>

<pallas_src>
import functools
import math

import jax
import jax.numpy as jnp
from jax.experimental import pallas as pl
from jax.experimental.pallas import tpu as pltpu


def _round_up(x, m):
    return (x + m - 1) // m * m


# --------------------------------------------------------------------------
# Kernel 1: batched input projection  xw[t*b] = x[t*b] @ W_ih + (b_ih + b_hh)
# --------------------------------------------------------------------------
def _input_proj_kernel(x_ref, w_ref, b_ref, out_ref):
    out_ref[...] = (
        jnp.dot(x_ref[...], w_ref[...], preferred_element_type=jnp.float32)
        + b_ref[...]
    )


def _input_projection(inp_flat, w_ih_p, b_p, *, matmul_dtype):
    """inp_flat: [R, In] (R = T*Bp, multiple of 8) -> [R, 4Hp] f32."""
    R, In = inp_flat.shape
    four_hp = w_ih_p.shape[1]

    tm = 256 if R >= 256 else R
    Rp = _round_up(R, tm)
    x = jnp.pad(inp_flat, ((0, Rp - R), (0, 0))).astype(matmul_dtype)

    mm_bytes = jnp.dtype(matmul_dtype).itemsize
    cost = pl.CostEstimate(
        flops=2 * Rp * In * four_hp,
        transcendentals=0,
        bytes_accessed=int(x.size * mm_bytes + w_ih_p.size * mm_bytes
                           + b_p.size * 4 + Rp * four_hp * 4),
    )
    vmem_limit = int(min(max(
        4 * (tm * In * mm_bytes + In * four_hp * mm_bytes + tm * four_hp * 4),
        16 * 2**20), 64 * 2**20))

    out = pl.pallas_call(
        _input_proj_kernel,
        out_shape=jax.ShapeDtypeStruct((Rp, four_hp), jnp.float32),
        grid=(Rp // tm,),
        in_specs=[
            pl.BlockSpec((tm, In), lambda i: (i, 0)),       # streamed rows
            pl.BlockSpec((In, four_hp), lambda i: (0, 0)),  # W_ih resident
            pl.BlockSpec((1, four_hp), lambda i: (0, 0)),   # folded bias resident
        ],
        out_specs=pl.BlockSpec((tm, four_hp), lambda i: (i, 0)),
        compiler_params=pltpu.CompilerParams(
            dimension_semantics=("parallel",),
            vmem_limit_bytes=vmem_limit),
        cost_estimate=cost,
    )(x, w_ih_p, b_p)
    return out[:R]


# --------------------------------------------------------------------------
# Kernel 2: recurrent loop.  One grid step == one timestep; state lives in the
# VMEM-resident output blocks, W_hh is VMEM-resident across all steps.
# --------------------------------------------------------------------------
def _lstm_recurrent_kernel(xw_ref, cell0_ref, hid0_ref, w_hh_ref,
                           cell_ref, hid_ref, *, hp, mm_dtype):
    t = pl.program_id(0)

    @pl.when(t == 0)
    def _():
        cell_ref[...] = cell0_ref[...]
        hid_ref[...] = hid0_ref[...]

    h = hid_ref[...].astype(mm_dtype)            # [B, Hp]
    c = cell_ref[...]                            # [B, Hp]  f32

    # Single recurrent MXU matmul; the input projection + bias are already
    # folded into the streamed xw block.
    pre = xw_ref[0] + jnp.dot(h, w_hh_ref[...],
                              preferred_element_type=jnp.float32)  # [B, 4Hp]

    # Gate-blocked layout: gate g occupies lanes [g*Hp, (g+1)*Hp), Hp % 128 == 0.
    i_pre = pre[:, 0 * hp:1 * hp]
    f_pre = pre[:, 1 * hp:2 * hp]
    c_pre = pre[:, 2 * hp:3 * hp]
    o_pre = pre[:, 3 * hp:4 * hp]

    input_gate = jax.nn.sigmoid(i_pre)
    forget_gate = jax.nn.sigmoid(f_pre)
    cell_gate = jnp.tanh(c_pre)
    output_gate = jax.nn.sigmoid(o_pre)

    new_cell = forget_gate * c + input_gate * cell_gate
    cell_ref[...] = new_cell
    # Matches the reference module exactly: NO tanh on the new cell state.
    hid_ref[...] = output_gate * new_cell


def lstm_forward_seq(inp_seq, cell0, hidden0, w_ih, b_ih, w_hh, b_hh,
                     *, matmul_dtype=jnp.float32):
    """Run T LSTM steps.

    inp_seq: [T, B, input_size]
    cell0, hidden0: [B, H]
    w_ih: [input_size, 4H]   (transposed vs torch nn.Linear)
    b_ih: [1, 4H]
    w_hh: [H, 4H]
    b_hh: [1, 4H]
    Returns the final (cell, hidden), each [B, H].
    """
    T, B, In = inp_seq.shape
    H = cell0.shape[1]
    state_dtype = jnp.float32

    Bp = _round_up(B, 8)      # sublane-aligned batch
    Hp = _round_up(H, 128)    # lane-aligned hidden size

    def gate_pad_cols(w):
        # [..., 4H] -> [..., 4*Hp] with gate g placed at columns [g*Hp, g*Hp+H).
        lead = w.shape[:-1]
        w4 = w.reshape(lead + (4, H))
        w4 = jnp.pad(w4, [(0, 0)] * len(lead) + [(0, 0), (0, Hp - H)])
        return w4.reshape(lead + (4 * Hp,))

    w_ih_p = gate_pad_cols(w_ih).astype(matmul_dtype)                    # [In, 4Hp]
    w_hh_p = gate_pad_cols(
        jnp.pad(w_hh, ((0, Hp - H), (0, 0)))).astype(matmul_dtype)       # [Hp, 4Hp]
    b_p = gate_pad_cols((b_ih + b_hh).reshape(1, 4 * H)).astype(jnp.float32)

    inp_p = jnp.pad(inp_seq, ((0, 0), (0, Bp - B), (0, 0)))              # [T, Bp, In]
    cell_p = jnp.pad(cell0, ((0, Bp - B), (0, Hp - H))).astype(state_dtype)
    hid_p = jnp.pad(hidden0, ((0, Bp - B), (0, Hp - H))).astype(state_dtype)

    # ---- Phase 1: one big parallel matmul for all input projections -------
    xw = _input_projection(inp_p.reshape(T * Bp, In), w_ih_p, b_p,
                           matmul_dtype=matmul_dtype)                    # [T*Bp, 4Hp] f32
    xw = xw.reshape(T, Bp, 4 * Hp)

    # ---- Phase 2: sequential recurrence -----------------------------------
    def resident(shape):
        n = len(shape)
        return pl.BlockSpec(shape, lambda t, _n=n: (0,) * _n)

    in_specs = [
        pl.BlockSpec((1, Bp, 4 * Hp), lambda t: (t, 0, 0)),  # xw: streamed per step
        resident((Bp, Hp)),          # cell0   (read only at t==0)
        resident((Bp, Hp)),          # hidden0 (read only at t==0)
        resident((Hp, 4 * Hp)),      # W_hh    (VMEM-resident across all T steps)
    ]
    out_specs = (resident((Bp, Hp)), resident((Bp, Hp)))
    out_shape = (jax.ShapeDtypeStruct((Bp, Hp), state_dtype),
                 jax.ShapeDtypeStruct((Bp, Hp), state_dtype))

    mm_bytes = jnp.dtype(matmul_dtype).itemsize
    cost = pl.CostEstimate(
        flops=2 * T * Bp * Hp * 4 * Hp,
        transcendentals=4 * T * Bp * Hp,
        bytes_accessed=int(xw.size * 4 + w_hh_p.size * mm_bytes
                           + 4 * Bp * Hp * 4),
    )
    resident_bytes = (w_hh_p.size * mm_bytes + 4 * Bp * Hp * 4
                      + 2 * Bp * 4 * Hp * 4)
    vmem_limit = int(min(max(4 * resident_bytes, 16 * 2**20), 64 * 2**20))

    kernel = functools.partial(_lstm_recurrent_kernel, hp=Hp, mm_dtype=matmul_dtype)
    cell_out, hid_out = pl.pallas_call(
        kernel,
        out_shape=out_shape,
        grid=(T,),
        in_specs=in_specs,
        out_specs=out_specs,
        compiler_params=pltpu.CompilerParams(
            dimension_semantics=("arbitrary",),   # recurrent: steps are sequential
            vmem_limit_bytes=vmem_limit),
        cost_estimate=cost,
    )(xw, cell_p, hid_p, w_hh_p)

    return cell_out[:B, :H], hid_out[:B, :H]


def lstm_forward(inp, state, w_ih, b_ih, w_hh, b_hh, *, matmul_dtype=jnp.float32):
    """Single-step forward matching the PyTorch module API: returns (cell, hidden)."""
    cell, hidden = state
    return lstm_forward_seq(inp[None], cell, hidden, w_ih, b_ih, w_hh, b_hh,
                            matmul_dtype=matmul_dtype)


def init_lstm_params(key, input_size, hidden_size, dtype=jnp.float32):
    """Deterministic init matching the shapes of nn.Linear(in, 4H) (transposed)."""
    k1, k2, k3, k4 = jax.random.split(key, 4)
    bound_ih = 1.0 / math.sqrt(input_size)
    bound_hh = 1.0 / math.sqrt(hidden_size)
    w_ih = jax.random.uniform(k1, (input_size, 4 * hidden_size),
                              minval=-bound_ih, maxval=bound_ih, dtype=dtype)
    b_ih = jax.random.uniform(k2, (1, 4 * hidden_size),
                              minval=-bound_ih, maxval=bound_ih, dtype=dtype)
    w_hh = jax.random.uniform(k3, (hidden_size, 4 * hidden_size),
                              minval=-bound_hh, maxval=bound_hh, dtype=dtype)
    b_hh = jax.random.uniform(k4, (1, 4 * hidden_size),
                              minval=-bound_hh, maxval=bound_hh, dtype=dtype)
    return w_ih, b_ih, w_hh, b_hh


def _reference_step(inp, cell, hidden, w_ih, b_ih, w_hh, b_hh):
    H = cell.shape[1]
    pre = inp @ w_ih + b_ih + hidden @ w_hh + b_hh
    i, f, g, o = (pre[:, k * H:(k + 1) * H] for k in range(4))
    new_cell = jax.nn.sigmoid(f) * cell + jax.nn.sigmoid(i) * jnp.tanh(g)
    return new_cell, jax.nn.sigmoid(o) * new_cell


def _reference_seq(inp_seq, cell, hidden, w_ih, b_ih, w_hh, b_hh):
    def step(carry, x):
        c, h = carry
        c, h = _reference_step(x, c, h, w_ih, b_ih, w_hh, b_hh)
        return (c, h), None
    (c, h), _ = jax.lax.scan(step, (cell, hidden), inp_seq)
    return c, h


if __name__ == "__main__":
    key = jax.random.PRNGKey(0)
    seq_len, batch, input_size, hidden_size = 8, 8, 16, 32

    k_params, k_inp, k_cell, k_hid = jax.random.split(key, 4)
    w_ih, b_ih, w_hh, b_hh = init_lstm_params(k_params, input_size, hidden_size)

    inp_seq = jax.random.normal(k_inp, (seq_len, batch, input_size), dtype=jnp.float32)
    # init_hidden(bs) -> zeros; use small random state to exercise the math too.
    cell0 = jax.random.normal(k_cell, (batch, hidden_size), dtype=jnp.float32)
    hid0 = jax.random.normal(k_hid, (batch, hidden_size), dtype=jnp.float32)

    # --- f32 matmul path (v5e-friendly), whole sequence ----------------------
    cell_T, hid_T = lstm_forward_seq(inp_seq, cell0, hid0, w_ih, b_ih, w_hh, b_hh)
    jax.block_until_ready((cell_T, hid_T))
    ref_cell_T, ref_hid_T = _reference_seq(inp_seq, cell0, hid0, w_ih, b_ih, w_hh, b_hh)
    assert jnp.allclose(cell_T, ref_cell_T, atol=1e-4, rtol=1e-4)
    assert jnp.allclose(hid_T, ref_hid_T, atol=1e-4, rtol=1e-4)

    # --- single step: exact module semantics forward(inp, (cell, hidden)) ----
    cell_1, hid_1 = lstm_forward(inp_seq[0], (cell0, hid0), w_ih, b_ih, w_hh, b_hh)
    jax.block_until_ready((cell_1, hid_1))
    ref_cell_1, ref_hid_1 = _reference_step(inp_seq[0], cell0, hid0, w_ih, b_ih, w_hh, b_hh)
    assert jnp.allclose(cell_1, ref_cell_1, atol=1e-4, rtol=1e-4)
    assert jnp.allclose(hid_1, ref_hid_1, atol=1e-4, rtol=1e-4)

    # --- bf16 matmul path (v6e/v7x MXU fast path); gate math stays f32 -------
    cell_bf, hid_bf = lstm_forward_seq(inp_seq, cell0, hid0, w_ih, b_ih, w_hh, b_hh,
                                       matmul_dtype=jnp.bfloat16)
    jax.block_until_ready((cell_bf, hid_bf))
    assert jnp.allclose(cell_bf, ref_cell_T, atol=1e-1, rtol=1e-1)
    assert jnp.allclose(hid_bf, ref_hid_T, atol=1e-1, rtol=1e-1)

    print("KERNEL_OK")
</pallas_src>

<mosaic_0001>
module attributes {stable_mosaic.version = 11 : i64} {
  func.func @_input_proj_kernel(%arg0: i32, %arg1: memref<64x16xf32, #tpu.memory_space<vmem>>, %arg2: memref<16x512xf32, #tpu.memory_space<vmem>>, %arg3: memref<1x512xf32, #tpu.memory_space<vmem>>, %arg4: memref<64x512xf32, #tpu.memory_space<vmem>>) attributes {dimension_semantics = [#tpu.dimension_semantics<parallel>], iteration_bounds = array<i64: 1>, scalar_prefetch = 0 : i64, scratch_operands = 0 : i64, tpu.core_type = #tpu.core_type<tc>, window_params = [{transform_indices = @transform_0, window_bounds = array<i64: 64, 16>}, {pipeline_mode = #tpu.pipeline_mode<synchronous>, transform_indices = @transform_1, window_bounds = array<i64: 16, 512>}, {pipeline_mode = #tpu.pipeline_mode<synchronous>, transform_indices = @transform_2, window_bounds = array<i64: 1, 512>}, {transform_indices = @transform_3, window_bounds = array<i64: 64, 512>}]} {
    %c0 = arith.constant 0 : index
    %c0_0 = arith.constant 0 : index
    %0 = vector.load %arg1[%c0, %c0_0] : memref<64x16xf32, #tpu.memory_space<vmem>>, vector<64x16xf32>
    %c0_1 = arith.constant 0 : index
    %c0_2 = arith.constant 0 : index
    %1 = vector.load %arg2[%c0_1, %c0_2] : memref<16x512xf32, #tpu.memory_space<vmem>>, vector<16x512xf32>
    %cst = arith.constant dense<0.000000e+00> : vector<64x512xf32>
    %2 = tpu.matmul %0, %1, %cst {dimension_numbers = #tpu.dot_dimension_numbers<[1], [0], [0], [1], [0, 0, 1, 1], [], []>} : vector<64x16xf32>, vector<16x512xf32>, vector<64x512xf32> -> vector<64x512xf32>
    %c0_3 = arith.constant 0 : index
    %c0_4 = arith.constant 0 : index
    %3 = vector.load %arg3[%c0_3, %c0_4] : memref<1x512xf32, #tpu.memory_space<vmem>>, vector<1x512xf32>
    %4 = vector.broadcast %3 : vector<1x512xf32> to vector<64x512xf32>
    %5 = arith.addf %2, %4 : vector<64x512xf32>
    %c0_5 = arith.constant 0 : index
    %c0_6 = arith.constant 0 : index
    %6 = vector.load %arg4[%c0_5, %c0_6] : memref<64x512xf32, #tpu.memory_space<vmem>>, vector<64x512xf32>
    tpu.vector_store %arg4[%c0_5, %c0_6], %5 {strides = array<i32>} : memref<64x512xf32, #tpu.memory_space<vmem>>, vector<64x512xf32>,
    return
  }
  func.func @transform_0(%arg0: i32) -> (i32, i32) {
    %c0_i32 = arith.constant 0 : i32
    %c0_i32_0 = arith.constant 0 : i32
    return %arg0, %c0_i32 : i32, i32
  }
  func.func @transform_1(%arg0: i32) -> (i32, i32) {
    %c0_i32 = arith.constant 0 : i32
    %c0_i32_0 = arith.constant 0 : i32
    %c0_i32_1 = arith.constant 0 : i32
    return %c0_i32, %c0_i32_0 : i32, i32
  }
  func.func @transform_2(%arg0: i32) -> (i32, i32) {
    %c0_i32 = arith.constant 0 : i32
    %c0_i32_0 = arith.constant 0 : i32
    %c0_i32_1 = arith.constant 0 : i32
    return %c0_i32, %c0_i32_0 : i32, i32
  }
  func.func @transform_3(%arg0: i32) -> (i32, i32) {
    %c0_i32 = arith.constant 0 : i32
    %c0_i32_0 = arith.constant 0 : i32
    return %arg0, %c0_i32 : i32, i32
  }
}

</mosaic_0001>

<llo_original>
// kernel: tpu_custom_call.1
$region0: #{tpu_custom_call.1}
  #allocation0 [shape = 'u32[]', space=smem, size = 0x4, offset = 0x4, fixed_abs, tag = 'smem constant byte address 0x4 - core index']
  #allocation1 [shape = 'u32[144,128]{1,0:T(1,128)}', space=vmem, size = 0x12000, scoped, tag = 'internal scratch']
  %s0 = inlined_call_operand.vmem [shape: f32[64,16], index: 0, kind: input, shape index: {}]
  %s1 = inlined_call_operand.vmem [shape: f32[16,512], index: 1, kind: input, shape index: {}]
  %s2 = inlined_call_operand.vmem [shape: f32[1,512], index: 2, kind: input, shape index: {}]
  %s3 = inlined_call_operand.hbm [shape: f32[64,512], index: 3, kind: output, shape index: {}]
  %s4 = sld [smem:[#allocation0]]
  $region22: #{tpu_custom_call.1} parent=0
    _
  %s6 = ssub.s32 1, %s4
  %s7 = scalar_select 0, %s6, %s4
  $region1: #{tpu_custom_call.1} parent=0
    #allocation2 [shape = 'u8[131072]{0}', space=vmem, size = 0x20000, scoped, tag = 'output window, operand 0, single buffered']
    #allocation3 [shape = 's32[1]{0}', space=sflag, size = 0x4, scoped, tag = 'scoped memory for tpu_custom_call.1']
    %8 = vsyncpa [#allocation3], 0
    // Predicated region
    $region2: #{tpu_custom_call.1} parent=1 // pred_check
      _
    $region3: #{tpu_custom_call.1} parent=1 // pred_check_branch
      %10 = sbr.rel (0) target = $region5
    $region4: #{tpu_custom_call.1} parent=1 // pred_region
      _
    $region5: #{tpu_custom_call.1} parent=1 // pred_fallthru
      _
    // Predicated region
    $region6: #{tpu_custom_call.1} parent=1 // pred_check
      _
    $region7: #{tpu_custom_call.1} parent=1 // pred_check_branch
      %12 = sbr.rel (0) target = $region9
    $region8: #{tpu_custom_call.1} parent=1 // pred_region
      _
    $region9: #{tpu_custom_call.1} parent=1 // pred_fallthru
      _
    // Predicated region
    $region10: #{tpu_custom_call.1} parent=1 // pred_check
      _
    $region11: #{tpu_custom_call.1} parent=1 // pred_check_branch
      %14 = sbr.rel (0) target = $region13
    $region12: #{tpu_custom_call.1} parent=1 // pred_region
      _
    $region13: #{tpu_custom_call.1} parent=1 // pred_fallthru
      _
    %v15 = vld [vmem:[%s0] sm:$0xff]
    %v16 = vld [vmem:[%s0 + $0x8] sm:$0xff]
    %v17 = vld [vmem:[%s0 + $0x10] sm:$0xff]
    %v18 = vld [vmem:[%s0 + $0x18] sm:$0xff]
    %v19 = vld [vmem:[%s0 + $0x20] sm:$0xff]
    %v20 = vld [vmem:[%s0 + $0x28] sm:$0xff]
    %v21 = vld [vmem:[%s0 + $0x30] sm:$0xff]
    %v22 = vld [vmem:[%s0 + $0x38] sm:$0xff]
    %v23 = vld [vmem:[%s1] sm:$0xff]
    %v24 = vld [vmem:[%s1 + $0x8] sm:$0xff]
    %v25 = vld [vmem:[%s1 + $0x10] sm:$0xff]
    %v26 = vld [vmem:[%s1 + $0x18] sm:$0xff]
    %v27 = vld [vmem:[%s1 + $0x20] sm:$0xff]
    %v28 = vld [vmem:[%s1 + $0x28] sm:$0xff]
    %v29 = vld [vmem:[%s1 + $0x30] sm:$0xff]
    %v30 = vld [vmem:[%s1 + $0x38] sm:$0xff]
    %v31 = vld [vmem:[%s2] sm:$0xf]
    %v33 = vlaneseq
    %v34 = vshrl.u32 %v33, 7
    %v35 = vsub.s32 0, %v34
    %v36 = vrot.slane %v31, %v35
    %v37 = vlaneseq
    %v38 = vshrl.u32 %v37, 7
    %v39 = vsub.s32 1, %v38
    %v40 = vrot.slane %v31, %v39
    %v41 = vlaneseq
    %v42 = vshrl.u32 %v41, 7
    %v43 = vsub.s32 2, %v42
    %v44 = vrot.slane %v31, %v43
    %v45 = vlaneseq
    %v46 = vshrl.u32 %v45, 7
    %v47 = vsub.s32 3, %v46
    %v48 = vrot.slane %v31, %v47
    %vm53 = vcmask 130048
    %v55 = vsel %vm53, %v15, 0
    %v58 = vsel %vm53, %v16, 0
    %v61 = vsel %vm53, %v17, 0
    %v64 = vsel %vm53, %v18, 0
    %v67 = vsel %vm53, %v19, 0
    %v70 = vsel %vm53, %v20, 0
    %v73 = vsel %vm53, %v21, 0
    %v76 = vsel %vm53, %v22, 0
    %78 = vmatprep.subr.mxu0 %v24
    %79 = vmatpush1.msra.mxu0 %v23
    %80 = vmatprep.subr.mxu0 %v28
    %81 = vmatpush1.msra.mxu0 %v27
    %82 = vmatprep.subr.mxu0 0.0
    %83 = vmatpush1.msra.mxu0 0.0
    %84 = vmatprep.subr.mxu0 0.0
    %85 = vmatpush1.msra.mxu0 0.0
    %86 = vmatprep.subr.mxu0 0.0
    %87 = vmatpush1.msra.mxu0 0.0
    %88 = vmatprep.subr.mxu0 0.0
    %89 = vmatpush1.msra.mxu0 0.0
    %90 = vmatprep.subr.mxu0 0.0
    %91 = vmatpush1.msra.mxu0 0.0
    %92 = vmatprep.subr.mxu0 0.0
    %93 = vmatpush1.msra.mxu0 0.0
    %94 = vmatprep.subr.mxu0 0.0
    %95 = vmatpush1.msra.mxu0 0.0
    %96 = vmatprep.subr.mxu0 0.0
    %97 = vmatpush1.msra.mxu0 0.0
    %98 = vmatprep.subr.mxu0 0.0
    %99 = vmatpush1.msra.mxu0 0.0
    %100 = vmatprep.subr.mxu0 0.0
    %101 = vmatpush1.msra.mxu0 0.0
    %102 = vmatprep.subr.mxu0 0.0
    %103 = vmatpush1.msra.mxu0 0.0
    %104 = vmatprep.subr.mxu0 0.0
    %105 = vmatpush1.msra.mxu0 0.0
    %106 = vmatprep.subr.mxu0 0.0
    %107 = vmatpush1.msra.mxu0 0.0
    %108 = vmatprep.subr.mxu0 0.0
    %109 = vmatpush1.msra.mxu0 0.0
    %110 = vmatprep.subr.mxu0 0.0
    %111 = vmatpush1.msra.mxu0 0.0
    %112 = vmatprep.subr.mxu0 0.0
    %113 = vmatpush1.msra.mxu0 0.0
    %114 = vmatprep.subr.mxu0 0.0
    %115 = vmatpush1.msra.mxu0 0.0
    %116 = vmatprep.subr.mxu0 0.0
    %117 = vmatpush1.msra.mxu0 0.0
    %118 = vmatprep.subr.mxu0 0.0
    %119 = vmatpush1.msra.mxu0 0.0
    %120 = vmatprep.subr.mxu0 0.0
    %121 = vmatpush1.msra.mxu0 0.0
    %122 = vmatprep.subr.mxu0 0.0
    %123 = vmatpush1.msra.mxu0 0.0
    %124 = vmatprep.subr.mxu0 0.0
    %125 = vmatpush1.msra.mxu0 0.0
    %126 = vmatprep.subr.mxu0 0.0
    %127 = vmatpush1.msra.mxu0 0.0
    %128 = vmatprep.subr.mxu0 0.0
    %129 = vmatpush1.msra.mxu0 0.0
    %130 = vmatprep.subr.mxu0 0.0
    %131 = vmatpush1.msra.mxu0 0.0
    %132 = vmatprep.subr.mxu0 0.0
    %133 = vmatpush1.msra.mxu0 0.0
    %134 = vmatprep.subr.mxu0 0.0
    %135 = vmatpush1.msra.mxu0 0.0
    %136 = vmatprep.subr.mxu0 0.0
    %137 = vmatpush1.msra.mxu0 0.0
    %138 = vmatprep.subr.mxu0 0.0
    %139 = vmatpush1.msra.mxu0 0.0
    %140 = vmatprep.subr.mxu0 0.0
    %141 = vmatpush1.msra.mxu0 0.0
    %142 = vmatprep.mubr.f32.mxu0 0.0
    %143 = vmatmul.mubr.f32.gmra.mrb[0].mxu0 %v55
    %v144 = vpop.f32.mrb[0].mxu0
    %v145 = vadd.f32 %v36, %v144
    %v146 = vpop.f32.mrb[0].mxu0
    %v147 = vadd.f32 %v40, %v146
    %148 = vmatprep.mubr.f32.mxu0 0.0
    %149 = vmatmul.mubr.f32.gmra.mrb[0].mxu0 %v58
    %v150 = vpop.f32.mrb[0].mxu0
    %v151 = vadd.f32 %v36, %v150
    %v152 = vpop.f32.mrb[0].mxu0
    %v153 = vadd.f32 %v40, %v152
    %154 = vmatprep.mubr.f32.mxu0 0.0
    %155 = vmatmul.mubr.f32.gmra.mrb[0].mxu0 %v61
    %v156 = vpop.f32.mrb[0].mxu0
    %v157 = vadd.f32 %v36, %v156
    %v158 = vpop.f32.mrb[0].mxu0
    %v159 = vadd.f32 %v40, %v158
    %160 = vmatprep.mubr.f32.mxu0 0.0
    %161 = vmatmul.mubr.f32.gmra.mrb[0].mxu0 %v64
    %v162 = vpop.f32.mrb[0].mxu0
    %v163 = vadd.f32 %v36, %v162
    %v164 = vpop.f32.mrb[0].mxu0
    %v165 = vadd.f32 %v40, %v164
    %166 = vmatprep.mubr.f32.mxu0 0.0
    %167 = vmatmul.mubr.f32.gmra.mrb[0].mxu0 %v67
    %v168 = vpop.f32.mrb[0].mxu0
    %v169 = vadd.f32 %v36, %v168
    %v170 = vpop.f32.mrb[0].mxu0
    %v171 = vadd.f32 %v40, %v170
    %172 = vmatprep.mubr.f32.mxu0 0.0
    %173 = vmatmul.mubr.f32.gmra.mrb[0].mxu0 %v70
    %v174 = vpop.f32.mrb[0].mxu0
    %v175 = vadd.f32 %v36, %v174
    %v176 = vpop.f32.mrb[0].mxu0
    %v177 = vadd.f32 %v40, %v176
    %178 = vmatprep.mubr.f32.mxu0 0.0
    %179 = vmatmul.mubr.f32.gmra.mrb[0].mxu0 %v73
    %v180 = vpop.f32.mrb[0].mxu0
    %v181 = vadd.f32 %v36, %v180
    %v182 = vpop.f32.mrb[0].mxu0
    %v183 = vadd.f32 %v40, %v182
    %184 = vmatprep.mubr.f32.mxu0 0.0
    %185 = vmatmul.mubr.f32.gmra.mrb[0].mxu0 %v76
    %v186 = vpop.f32.mrb[0].mxu0
    %v187 = vadd.f32 %v36, %v186
    %v188 = vpop.f32.mrb[0].mxu0
    %v189 = vadd.f32 %v40, %v188
    %190 = vdwg.mxu0
    %191 = vmatprep.subr.mxu0 %v26
    %192 = vmatpush1.msra.mxu0 %v25
    %193 = vmatprep.subr.mxu0 %v30
    %194 = vmatpush1.msra.mxu0 %v29
    %195 = vmatprep.subr.mxu0 0.0
    %196 = vmatpush1.msra.mxu0 0.0
    %197 = vmatprep.subr.mxu0 0.0
    %198 = vmatpush1.msra.mxu0 0.0
    %199 = vmatprep.subr.mxu0 0.0
    %200 = vmatpush1.msra.mxu0 0.0
    %201 = vmatprep.subr.mxu0 0.0
    %202 = vmatpush1.msra.mxu0 0.0
    %203 = vmatprep.subr.mxu0 0.0
    %204 = vmatpush1.msra.mxu0 0.0
    %205 = vmatprep.subr.mxu0 0.0
    %206 = vmatpush1.msra.mxu0 0.0
    %207 = vmatprep.subr.mxu0 0.0
    %208 = vmatpush1.msra.mxu0 0.0
    %209 = vmatprep.subr.mxu0 0.0
    %210 = vmatpush1.msra.mxu0 0.0
    %211 = vmatprep.subr.mxu0 0.0
    %212 = vmatpush1.msra.mxu0 0.0
    %213 = vmatprep.subr.mxu0 0.0
    %214 = vmatpush1.msra.mxu0 0.0
    %215 = vmatprep.subr.mxu0 0.0
    %216 = vmatpush1.msra.mxu0 0.0
    %217 = vmatprep.subr.mxu0 0.0
    %218 = vmatpush1.msra.mxu0 0.0
    %219 = vmatprep.subr.mxu0 0.0
    %220 = vmatpush1.msra.mxu0 0.0
    %221 = vmatprep.subr.mxu0 0.0
    %222 = vmatpush1.msra.mxu0 0.0
    %223 = vmatprep.subr.mxu0 0.0
    %224 = vmatpush1.msra.mxu0 0.0
    %225 = vmatprep.subr.mxu0 0.0
    %226 = vmatpush1.msra.mxu0 0.0
    %227 = vmatprep.subr.mxu0 0.0
    %228 = vmatpush1.msra.mxu0 0.0
    %229 = vmatprep.subr.mxu0 0.0
    %230 = vmatpush1.msra.mxu0 0.0
    %231 = vmatprep.subr.mxu0 0.0
    %232 = vmatpush1.msra.mxu0 0.0
    %233 = vmatprep.subr.mxu0 0.0
    %234 = vmatpush1.msra.mxu0 0.0
    %235 = vmatprep.subr.mxu0 0.0
    %236 = vmatpush1.msra.mxu0 0.0
    %237 = vmatprep.subr.mxu0 0.0
    %238 = vmatpush1.msra.mxu0 0.0
    %239 = vmatprep.subr.mxu0 0.0
    %240 = vmatpush1.msra.mxu0 0.0
    %241 = vmatprep.subr.mxu0 0.0
    %242 = vmatpush1.msra.mxu0 0.0
    %243 = vmatprep.subr.mxu0 0.0
    %244 = vmatpush1.msra.mxu0 0.0
    %245 = vmatprep.subr.mxu0 0.0
    %246 = vmatpush1.msra.mxu0 0.0
    %247 = vmatprep.subr.mxu0 0.0
    %248 = vmatpush1.msra.mxu0 0.0
    %249 = vmatprep.subr.mxu0 0.0
    %250 = vmatpush1.msra.mxu0 0.0
    %251 = vmatprep.subr.mxu0 0.0
    %252 = vmatpush1.msra.mxu0 0.0
    %253 = vmatprep.subr.mxu0 0.0
    %254 = vmatpush1.msra.mxu0 0.0
    %255 = vmatprep.mubr.f32.mxu0 0.0
    %256 = vmatmul.mubr.f32.gmra.mrb[0].mxu0 %v55
    %v257 = vpop.f32.mrb[0].mxu0
    %v258 = vadd.f32 %v44, %v257
    %v259 = vpop.f32.mrb[0].mxu0
    %v260 = vadd.f32 %v48, %v259
    %261 = vmatprep.mubr.f32.mxu0 0.0
    %262 = vmatmul.mubr.f32.gmra.mrb[0].mxu0 %v58
    %v263 = vpop.f32.mrb[0].mxu0
    %v264 = vadd.f32 %v44, %v263
    %v265 = vpop.f32.mrb[0].mxu0
    %v266 = vadd.f32 %v48, %v265
    %267 = vmatprep.mubr.f32.mxu0 0.0
    %268 = vmatmul.mubr.f32.gmra.mrb[0].mxu0 %v61
    %v269 = vpop.f32.mrb[0].mxu0
    %v270 = vadd.f32 %v44, %v269
    %v271 = vpop.f32.mrb[0].mxu0
    %v272 = vadd.f32 %v48, %v271
    %273 = vmatprep.mubr.f32.mxu0 0.0
    %274 = vmatmul.mubr.f32.gmra.mrb[0].mxu0 %v64
    %v275 = vpop.f32.mrb[0].mxu0
    %v276 = vadd.f32 %v44, %v275
    %v277 = vpop.f32.mrb[0].mxu0
    %v278 = vadd.f32 %v48, %v277
    %279 = vmatprep.mubr.f32.mxu0 0.0
    %280 = vmatmul.mubr.f32.gmra.mrb[0].mxu0 %v67
    %v281 = vpop.f32.mrb[0].mxu0
    %v282 = vadd.f32 %v44, %v281
    %v283 = vpop.f32.mrb[0].mxu0
    %v284 = vadd.f32 %v48, %v283
    %285 = vmatprep.mubr.f32.mxu0 0.0
    %286 = vmatmul.mubr.f32.gmra.mrb[0].mxu0 %v70
    %v287 = vpop.f32.mrb[0].mxu0
    %v288 = vadd.f32 %v44, %v287
    %v289 = vpop.f32.mrb[0].mxu0
    %v290 = vadd.f32 %v48, %v289
    %291 = vmatprep.mubr.f32.mxu0 0.0
    %292 = vmatmul.mubr.f32.gmra.mrb[0].mxu0 %v73
    %v293 = vpop.f32.mrb[0].mxu0
    %v294 = vadd.f32 %v44, %v293
    %v295 = vpop.f32.mrb[0].mxu0
    %v296 = vadd.f32 %v48, %v295
    %297 = vmatprep.mubr.f32.mxu0 0.0
    %298 = vmatmul.mubr.f32.gmra.mrb[0].mxu0 %v76
    %v299 = vpop.f32.mrb[0].mxu0
    %v300 = vadd.f32 %v44, %v299
    %v301 = vpop.f32.mrb[0].mxu0
    %v302 = vadd.f32 %v48, %v301
    %303 = vdwg.mxu0
    %304 = vst [vmem:[#allocation2] sm:$0xff] %v145
    %305 = vst [vmem:[#allocation2 + $0x8] sm:$0xff] %v147
    %306 = vst [vmem:[#allocation2 + $0x10] sm:$0xff] %v258
    %307 = vst [vmem:[#allocation2 + $0x18] sm:$0xff] %v260
    %308 = vst [vmem:[#allocation2 + $0x20] sm:$0xff] %v151
    %309 = vst [vmem:[#allocation2 + $0x28] sm:$0xff] %v153
    %310 = vst [vmem:[#allocation2 + $0x30] sm:$0xff] %v264
    %311 = vst [vmem:[#allocation2 + $0x38] sm:$0xff] %v266
    %312 = vst [vmem:[#allocation2 + $0x40] sm:$0xff] %v157
    %313 = vst [vmem:[#allocation2 + $0x48] sm:$0xff] %v159
    %314 = vst [vmem:[#allocation2 + $0x50] sm:$0xff] %v270
    %315 = vst [vmem:[#allocation2 + $0x58] sm:$0xff] %v272
    %316 = vst [vmem:[#allocation2 + $0x60] sm:$0xff] %v163
    %317 = vst [vmem:[#allocation2 + $0x68] sm:$0xff] %v165
    %318 = vst [vmem:[#allocation2 + $0x70] sm:$0xff] %v276
    %319 = vst [vmem:[#allocation2 + $0x78] sm:$0xff] %v278
    %320 = vst [vmem:[#allocation2 + $0x80] sm:$0xff] %v169
    %321 = vst [vmem:[#allocation2 + $0x88] sm:$0xff] %v171
    %322 = vst [vmem:[#allocation2 + $0x90] sm:$0xff] %v282
    %323 = vst [vmem:[#allocation2 + $0x98] sm:$0xff] %v284
    %324 = vst [vmem:[#allocation2 + $0xa0] sm:$0xff] %v175
    %325 = vst [vmem:[#allocation2 + $0xa8] sm:$0xff] %v177
    %326 = vst [vmem:[#allocation2 + $0xb0] sm:$0xff] %v288
    %327 = vst [vmem:[#allocation2 + $0xb8] sm:$0xff] %v290
    %328 = vst [vmem:[#allocation2 + $0xc0] sm:$0xff] %v181
    %329 = vst [vmem:[#allocation2 + $0xc8] sm:$0xff] %v183
    %330 = vst [vmem:[#allocation2 + $0xd0] sm:$0xff] %v294
    %331 = vst [vmem:[#allocation2 + $0xd8] sm:$0xff] %v296
    %332 = vst [vmem:[#allocation2 + $0xe0] sm:$0xff] %v187
    %333 = vst [vmem:[#allocation2 + $0xe8] sm:$0xff] %v189
    %334 = vst [vmem:[#allocation2 + $0xf0] sm:$0xff] %v300
    %335 = vst [vmem:[#allocation2 + $0xf8] sm:$0xff] %v302
    // Predicated region
    $region14: #{tpu_custom_call.1} parent=1 // pred_check
      _
    $region15: #{tpu_custom_call.1} parent=1 // pred_check_branch
      %337 = sbr.rel (0) target = $region17
    $region16: #{tpu_custom_call.1} parent=1 // pred_region
      %s339 = ssub.s32 4096, 4096
      %340 = vsyncadd [#allocation3], %s339
      %s341 = sshll.u32 [#allocation2], 4
      %s342 = int_to_ptr.vmem [resolvable:$true] %s341
      %347 = dma.vmem_to_hbm [thread:$0]  %s342, 4096, %s3, [#allocation3], 512, 512, 32
    $region17: #{tpu_custom_call.1} parent=1 // pred_fallthru
      _
    // Predicated region
    $region18: #{tpu_custom_call.1} parent=1 // pred_check
      _
    $region19: #{tpu_custom_call.1} parent=1 // pred_check_branch
      %349 = sbr.rel (0) target = $region21
    $region20: #{tpu_custom_call.1} parent=1 // pred_region
      %350 = dma.done [#allocation3], 4096
    $region21: #{tpu_custom_call.1} parent=1 // pred_fallthru
      _
    %351 = vsyncpa [#allocation3], 1

</llo_original>
